<compile_context>
chip_gen: v5e
topology: v5e:2x2
jax: 0.10.0
libtpu: 0.0.40
codegen_flags: <defaults>
</compile_context>

<pallas_src>
import functools

import jax
import jax.numpy as jnp
from jax import lax
from jax.experimental import pallas as pl
from jax.experimental.pallas import tpu as pltpu


def _round_up(n, m):
    return ((n + m - 1) // m) * m


# ----------------------------------------------------------------------------
# Kernel
# ----------------------------------------------------------------------------
def _mlp_kernel(xt_ref, w1_ref, b1_ref, w2_ref, b2_ref, ot_ref, *, chunk):
    """Fused fc1 -> ReLU -> fc2 on one lane-dense batch tile.

    xt_ref: (8, tb)   w1: (64, 8)   b1: (64, 1)   w2: (2, 64)   b2: (2, 1)
    ot_ref: (2, tb)
    The tile is processed in `chunk`-lane slices so the f32 intermediate h is
    only (64, chunk) regardless of tb.
    """
    tb = xt_ref.shape[-1]
    n_chunks = tb // chunk

    w1 = w1_ref[...]
    b1 = b1_ref[...]
    w2 = w2_ref[...]
    b2 = b2_ref[...]

    def body(c, carry):
        start = pl.multiple_of(c * chunk, 128)
        xt = xt_ref[:, pl.ds(start, chunk)]
        # fc1: (64, 8) @ (8, chunk) -> (64, chunk), f32 MXU accumulation.
        h = jnp.dot(w1, xt, preferred_element_type=jnp.float32)
        # Bias + ReLU in f32 (portable to v5e; VALU slack is hidden under DMA).
        h = jnp.maximum(h + b1, 0.0)
        # fc2: (2, 64) @ (64, chunk) -> (2, chunk), f32 accumulation.
        out = jnp.dot(w2, h.astype(w2.dtype),
                      preferred_element_type=jnp.float32) + b2
        ot_ref[:, pl.ds(start, chunk)] = out.astype(ot_ref.dtype)
        return carry

    lax.fori_loop(0, n_chunks, body, 0, unroll=False)


# ----------------------------------------------------------------------------
# Tile planning & pallas_call wrapper
# ----------------------------------------------------------------------------
_LANE_CHUNK = 2048  # compute-chunk width (multiple of 128 lanes)


def _plan_tiles(batch, block_batch, lane_chunk=_LANE_CHUNK):
    """Return (tb, chunk, b_pad) with tb % chunk == 0 and b_pad % tb == 0."""
    b128 = _round_up(batch, 128)
    if b128 <= lane_chunk:
        # Tiny batch: one tile, one chunk.
        return b128, b128, b128
    tb_cap = max(lane_chunk, _round_up(min(block_batch, b128), lane_chunk))
    # At least 2 grid steps so v7x can shard the batch across both TensorCores,
    # and spread the batch evenly to minimise tail-padding waste.
    n_steps = max(2, -(-b128 // tb_cap))
    tb = _round_up(-(-b128 // n_steps), lane_chunk)
    b_pad = _round_up(batch, tb)
    return tb, lane_chunk, b_pad


def _forward_padded(xt, w1, b1, w2, b2, *, tb, chunk):
    """xt: (8, b_pad) lane-dense, already padded/cast. Returns (2, b_pad) f32."""
    in_f, b_pad = xt.shape
    hid, out_f = w1.shape[0], w2.shape[0]
    cdt = xt.dtype

    # Per-step VMEM budget: double-buffered x/y tiles + f32 h chunk + weights.
    vmem_bytes = (2 * (in_f * tb * jnp.dtype(cdt).itemsize + out_f * tb * 4)
                  + 2 * hid * chunk * 4
                  + (hid * in_f + hid + out_f * hid + out_f) * 4)
    vmem_limit = int(min(max(2 * vmem_bytes, 16 << 20), 64 << 20))

    kernel = functools.partial(_mlp_kernel, chunk=chunk)
    return pl.pallas_call(
        kernel,
        out_shape=jax.ShapeDtypeStruct((out_f, b_pad), jnp.float32),
        grid=(b_pad // tb,),
        in_specs=[
            pl.BlockSpec((in_f, tb), lambda i: (0, i)),     # x^T tile: pipelined
            pl.BlockSpec((hid, in_f), lambda i: (0, 0)),    # w1: VMEM-resident
            pl.BlockSpec((hid, 1), lambda i: (0, 0)),       # b1: VMEM-resident
            pl.BlockSpec((out_f, hid), lambda i: (0, 0)),   # w2: VMEM-resident
            pl.BlockSpec((out_f, 1), lambda i: (0, 0)),     # b2: VMEM-resident
        ],
        out_specs=pl.BlockSpec((out_f, tb), lambda i: (0, i)),
        compiler_params=pltpu.CompilerParams(
            dimension_semantics=("parallel",),              # v7x dual-TC sharding
            vmem_limit_bytes=vmem_limit,
        ),
    )(xt,
      w1.astype(cdt),
      b1.reshape(hid, 1).astype(jnp.float32),
      w2.astype(cdt),
      b2.reshape(out_f, 1).astype(jnp.float32))


def _forward_xt_impl(xt, w1, b1, w2, b2, block_batch, compute_dtype):
    in_f, B = xt.shape
    if compute_dtype is None:
        # bf16 transfers for large (HBM-bound) batches, f32 for small ones.
        cdt = jnp.bfloat16 if B >= 16384 else xt.dtype
    else:
        cdt = compute_dtype
    tb, chunk, b_pad = _plan_tiles(B, block_batch)
    xt_p = jnp.pad(xt, ((0, 0), (0, b_pad - B))).astype(cdt)
    yt = _forward_padded(xt_p, w1, b1, w2, b2, tb=tb, chunk=chunk)
    return yt[:, :B]


@functools.partial(jax.jit, static_argnames=("block_batch", "compute_dtype"))
def diabetes_model_forward_xt(xt, w1, b1, w2, b2, *, block_batch=32768,
                              compute_dtype=None):
    """Feature-major entry point: xt is (8, B); returns (2, B) f32.
    Skips the wrapper-side transpose (an extra full HBM pass over x)."""
    return _forward_xt_impl(xt, w1, b1, w2, b2, block_batch, compute_dtype)


@functools.partial(jax.jit, static_argnames=("block_batch", "compute_dtype"))
def diabetes_model_forward(x, w1, b1, w2, b2, *, block_batch=32768,
                           compute_dtype=None):
    """PyTorch-equivalent interface: x (B, 8) -> (B, 2) f32.
    Jitted so the transpose + pad + cast fuse into a single copy feeding the
    kernel; prefer diabetes_model_forward_xt for zero-transpose input."""
    yt = _forward_xt_impl(x.T, w1, b1, w2, b2, block_batch, compute_dtype)
    return yt.T


# ----------------------------------------------------------------------------
# Params & reference
# ----------------------------------------------------------------------------
def init_params(key):
    """PyTorch nn.Linear-style init, (out_features, in_features) layout."""
    k1, k2, k3, k4 = jax.random.split(key, 4)
    bound1 = 1.0 / jnp.sqrt(8.0)
    bound2 = 1.0 / jnp.sqrt(64.0)
    w1 = jax.random.uniform(k1, (64, 8), jnp.float32, -bound1, bound1)
    b1 = jax.random.uniform(k2, (64,), jnp.float32, -bound1, bound1)
    w2 = jax.random.uniform(k3, (2, 64), jnp.float32, -bound2, bound2)
    b2 = jax.random.uniform(k4, (2,), jnp.float32, -bound2, bound2)
    return w1, b1, w2, b2


def _reference(x, w1, b1, w2, b2):
    return jnp.maximum(x @ w1.T + b1, 0.0) @ w2.T + b2


if __name__ == "__main__":
    key = jax.random.PRNGKey(0)
    kx, kp = jax.random.split(key)
    w1, b1, w2, b2 = init_params(kp)

    # Small f32 test (single tile, single chunk), (B, 8) interface.
    batch = 8
    x = jax.random.normal(kx, (batch, 8), jnp.float32)
    out = jax.block_until_ready(diabetes_model_forward(x, w1, b1, w2, b2))
    ref = _reference(x, w1, b1, w2, b2)
    assert out.shape == (batch, 2)
    assert jnp.allclose(out, ref, atol=1e-5, rtol=1e-5)

    # Feature-major entry point on the same data.
    out_xt = jax.block_until_ready(
        diabetes_model_forward_xt(x.T, w1, b1, w2, b2))
    assert out_xt.shape == (2, batch)
    assert jnp.allclose(out_xt.T, ref, atol=1e-5, rtol=1e-5)

    # Larger test: multiple grid steps, multiple in-kernel chunks, tail padding,
    # plus the bf16 transfer path (accuracy bounded by the bf16 input cast).
    xb = jax.random.normal(jax.random.PRNGKey(1), (4500, 8), jnp.float32)
    out_f32 = jax.block_until_ready(diabetes_model_forward(xb, w1, b1, w2, b2))
    out_bf16 = jax.block_until_ready(
        diabetes_model_forward(xb, w1, b1, w2, b2, compute_dtype=jnp.bfloat16))
    ref_b = _reference(xb, w1, b1, w2, b2)
    assert out_f32.shape == (4500, 2) and out_bf16.shape == (4500, 2)
    assert jnp.allclose(out_f32, ref_b, atol=1e-5, rtol=1e-5)
    assert jnp.allclose(out_bf16, ref_b, atol=1e-1, rtol=5e-2)

    print("KERNEL_OK")
</pallas_src>

<mosaic_0001>
module attributes {stable_mosaic.version = 11 : i64} {
  func.func @_mlp_kernel(%arg0: i32, %arg1: memref<8x128xf32, #tpu.memory_space<vmem>>, %arg2: memref<64x8xf32, #tpu.memory_space<vmem>>, %arg3: memref<64x1xf32, #tpu.memory_space<vmem>>, %arg4: memref<2x64xf32, #tpu.memory_space<vmem>>, %arg5: memref<2x1xf32, #tpu.memory_space<vmem>>, %arg6: memref<2x128xf32, #tpu.memory_space<vmem>>) attributes {dimension_semantics = [#tpu.dimension_semantics<parallel>], iteration_bounds = array<i64: 1>, scalar_prefetch = 0 : i64, scratch_operands = 0 : i64, tpu.core_type = #tpu.core_type<tc>, window_params = [{transform_indices = @transform_0, window_bounds = array<i64: 8, 128>}, {pipeline_mode = #tpu.pipeline_mode<synchronous>, transform_indices = @transform_1, window_bounds = array<i64: 64, 8>}, {pipeline_mode = #tpu.pipeline_mode<synchronous>, transform_indices = @transform_2, window_bounds = array<i64: 64, 1>}, {pipeline_mode = #tpu.pipeline_mode<synchronous>, transform_indices = @transform_3, window_bounds = array<i64: 2, 64>}, {pipeline_mode = #tpu.pipeline_mode<synchronous>, transform_indices = @transform_4, window_bounds = array<i64: 2, 1>}, {transform_indices = @transform_5, window_bounds = array<i64: 2, 128>}]} {
    %c0 = arith.constant 0 : index
    %c0_0 = arith.constant 0 : index
    %0 = vector.load %arg2[%c0, %c0_0] : memref<64x8xf32, #tpu.memory_space<vmem>>, vector<64x8xf32>
    %c0_1 = arith.constant 0 : index
    %c0_2 = arith.constant 0 : index
    %1 = vector.load %arg3[%c0_1, %c0_2] : memref<64x1xf32, #tpu.memory_space<vmem>>, vector<64x1xf32>
    %c0_3 = arith.constant 0 : index
    %c0_4 = arith.constant 0 : index
    %2 = vector.load %arg4[%c0_3, %c0_4] : memref<2x64xf32, #tpu.memory_space<vmem>>, vector<2x64xf32>
    %c0_5 = arith.constant 0 : index
    %c0_6 = arith.constant 0 : index
    %3 = vector.load %arg5[%c0_5, %c0_6] : memref<2x1xf32, #tpu.memory_space<vmem>>, vector<2x1xf32>
    %c0_i32 = arith.constant 0 : i32
    %c128_i32 = arith.constant 128 : i32
    %4 = arith.muli %c0_i32, %c128_i32 : i32
    %5 = tpu.assume_multiple %4, 128 : i32
    %c0_7 = arith.constant 0 : index
    %6 = arith.index_cast %5 : i32 to index
    %7 = vector.load %arg1[%c0_7, %6] : memref<8x128xf32, #tpu.memory_space<vmem>>, vector<8x128xf32>
    %cst = arith.constant dense<0.000000e+00> : vector<64x128xf32>
    %8 = tpu.matmul %0, %7, %cst {dimension_numbers = #tpu.dot_dimension_numbers<[1], [0], [0], [1], [0, 0, 1, 1], [], []>} : vector<64x8xf32>, vector<8x128xf32>, vector<64x128xf32> -> vector<64x128xf32>
    %9 = vector.broadcast %1 : vector<64x1xf32> to vector<64x128xf32>
    %10 = arith.addf %8, %9 : vector<64x128xf32>
    %cst_8 = arith.constant 0.000000e+00 : f32
    %11 = vector.broadcast %cst_8 : f32 to vector<64x128xf32>
    %12 = arith.maximumf %10, %11 : vector<64x128xf32>
    %cst_9 = arith.constant dense<0.000000e+00> : vector<2x128xf32>
    %13 = tpu.matmul %2, %12, %cst_9 {dimension_numbers = #tpu.dot_dimension_numbers<[1], [0], [0], [1], [0, 0, 1, 1], [], []>} : vector<2x64xf32>, vector<64x128xf32>, vector<2x128xf32> -> vector<2x128xf32>
    %14 = vector.broadcast %3 : vector<2x1xf32> to vector<2x128xf32>
    %15 = arith.addf %13, %14 : vector<2x128xf32>
    %c0_10 = arith.constant 0 : index
    %16 = arith.index_cast %5 : i32 to index
    %17 = vector.load %arg6[%c0_10, %16] : memref<2x128xf32, #tpu.memory_space<vmem>>, vector<2x128xf32>
    tpu.vector_store %arg6[%c0_10, %16], %15 {strides = array<i32>} : memref<2x128xf32, #tpu.memory_space<vmem>>, vector<2x128xf32>,
    %c1_i32 = arith.constant 1 : i32
    return
  }
  func.func @transform_0(%arg0: i32) -> (i32, i32) {
    %c0_i32 = arith.constant 0 : i32
    %c0_i32_0 = arith.constant 0 : i32
    return %c0_i32, %arg0 : i32, i32
  }
  func.func @transform_1(%arg0: i32) -> (i32, i32) {
    %c0_i32 = arith.constant 0 : i32
    %c0_i32_0 = arith.constant 0 : i32
    %c0_i32_1 = arith.constant 0 : i32
    return %c0_i32, %c0_i32_0 : i32, i32
  }
  func.func @transform_2(%arg0: i32) -> (i32, i32) {
    %c0_i32 = arith.constant 0 : i32
    %c0_i32_0 = arith.constant 0 : i32
    %c0_i32_1 = arith.constant 0 : i32
    return %c0_i32, %c0_i32_0 : i32, i32
  }
  func.func @transform_3(%arg0: i32) -> (i32, i32) {
    %c0_i32 = arith.constant 0 : i32
    %c0_i32_0 = arith.constant 0 : i32
    %c0_i32_1 = arith.constant 0 : i32
    return %c0_i32, %c0_i32_0 : i32, i32
  }
  func.func @transform_4(%arg0: i32) -> (i32, i32) {
    %c0_i32 = arith.constant 0 : i32
    %c0_i32_0 = arith.constant 0 : i32
    %c0_i32_1 = arith.constant 0 : i32
    return %c0_i32, %c0_i32_0 : i32, i32
  }
  func.func @transform_5(%arg0: i32) -> (i32, i32) {
    %c0_i32 = arith.constant 0 : i32
    %c0_i32_0 = arith.constant 0 : i32
    return %c0_i32, %arg0 : i32, i32
  }
}

</mosaic_0001>

<llo_original>
// kernel: diabetes_model_forward.1
$region0: #{diabetes_model_forward.1}
  #allocation0 [shape = 'u32[]', space=smem, size = 0x4, offset = 0x4, fixed_abs, tag = 'smem constant byte address 0x4 - core index']
  #allocation1 [shape = 'u32[72,128]{1,0:T(1,128)}', space=vmem, size = 0x9000, scoped, tag = 'internal scratch']
  %s0 = inlined_call_operand.vmem [shape: f32[8,128], index: 0, kind: input, shape index: {}]
  %s1 = inlined_call_operand.vmem [shape: f32[64,8], index: 1, kind: input, shape index: {}]
  %s2 = inlined_call_operand.vmem [shape: f32[64,1], index: 2, kind: input, shape index: {}]
  %s3 = inlined_call_operand.vmem [shape: f32[2,64], index: 3, kind: input, shape index: {}]
  %s4 = inlined_call_operand.vmem [shape: f32[2,1], index: 4, kind: input, shape index: {}]
  %s5 = inlined_call_operand.vmem [shape: f32[2,128], index: 5, kind: output, shape index: {}]
  %s6 = sld [smem:[#allocation0]]
  $region30: #{diabetes_model_forward.1} parent=0
    _
  %s8 = ssub.s32 1, %s6
  %s9 = scalar_select 0, %s8, %s6
  // Predicated region
  $region2: #{diabetes_model_forward.1} parent=0 // pred_check
    _
  $region3: #{diabetes_model_forward.1} parent=0 // pred_check_branch
    %11 = sbr.rel (0) target = $region5
  $region4: #{diabetes_model_forward.1} parent=0 // pred_region
    _
  $region5: #{diabetes_model_forward.1} parent=0 // pred_fallthru
    _
  // Predicated region
  $region6: #{diabetes_model_forward.1} parent=0 // pred_check
    _
  $region7: #{diabetes_model_forward.1} parent=0 // pred_check_branch
    %13 = sbr.rel (0) target = $region9
  $region8: #{diabetes_model_forward.1} parent=0 // pred_region
    _
  $region9: #{diabetes_model_forward.1} parent=0 // pred_fallthru
    _
  // Predicated region
  $region10: #{diabetes_model_forward.1} parent=0 // pred_check
    _
  $region11: #{diabetes_model_forward.1} parent=0 // pred_check_branch
    %15 = sbr.rel (0) target = $region13
  $region12: #{diabetes_model_forward.1} parent=0 // pred_region
    _
  $region13: #{diabetes_model_forward.1} parent=0 // pred_fallthru
    _
  // Predicated region
  $region14: #{diabetes_model_forward.1} parent=0 // pred_check
    _
  $region15: #{diabetes_model_forward.1} parent=0 // pred_check_branch
    %17 = sbr.rel (0) target = $region17
  $region16: #{diabetes_model_forward.1} parent=0 // pred_region
    _
  $region17: #{diabetes_model_forward.1} parent=0 // pred_fallthru
    _
  // Predicated region
  $region18: #{diabetes_model_forward.1} parent=0 // pred_check
    _
  $region19: #{diabetes_model_forward.1} parent=0 // pred_check_branch
    %19 = sbr.rel (0) target = $region21
  $region20: #{diabetes_model_forward.1} parent=0 // pred_region
    _
  $region21: #{diabetes_model_forward.1} parent=0 // pred_fallthru
    _
  %v20 = vld [vmem:[%s1] sm:$0xff]
  %v21 = vld [vmem:[%s1 + $0x8] sm:$0xff]
  %v22 = vld [vmem:[%s1 + $0x10] sm:$0xff]
  %v23 = vld [vmem:[%s1 + $0x18] sm:$0xff]
  %v24 = vld [vmem:[%s1 + $0x20] sm:$0xff]
  %v25 = vld [vmem:[%s1 + $0x28] sm:$0xff]
  %v26 = vld [vmem:[%s1 + $0x30] sm:$0xff]
  %v27 = vld [vmem:[%s1 + $0x38] sm:$0xff]
  %v28 = vld [vmem:[%s2] sm:$0xff]
  %v29 = vld [vmem:[%s2 + $0x8] sm:$0xff]
  %v30 = vld [vmem:[%s2 + $0x10] sm:$0xff]
  %v31 = vld [vmem:[%s2 + $0x18] sm:$0xff]
  %v32 = vld [vmem:[%s2 + $0x20] sm:$0xff]
  %v33 = vld [vmem:[%s2 + $0x28] sm:$0xff]
  %v34 = vld [vmem:[%s2 + $0x30] sm:$0xff]
  %v35 = vld [vmem:[%s2 + $0x38] sm:$0xff]
  %v36 = vld [vmem:[%s3] sm:$0x3]
  %v37 = vld [vmem:[%s4] sm:$0x3]
  %v38 = vld [vmem:[%s0] sm:$0xff]
  %40 = vset.pattern.permute.xlu0 0
  %41 = vperm.xlu0 %40, %v28
  %v42 = vpop.permute.xlu0 %41
  %45 = vset.pattern.permute.xlu0 0
  %46 = vperm.xlu0 %45, %v29
  %v47 = vpop.permute.xlu0 %46
  %50 = vset.pattern.permute.xlu0 0
  %51 = vperm.xlu0 %50, %v30
  %v52 = vpop.permute.xlu0 %51
  %55 = vset.pattern.permute.xlu0 0
  %56 = vperm.xlu0 %55, %v31
  %v57 = vpop.permute.xlu0 %56
  %60 = vset.pattern.permute.xlu0 0
  %61 = vperm.xlu0 %60, %v32
  %v62 = vpop.permute.xlu0 %61
  %65 = vset.pattern.permute.xlu0 0
  %66 = vperm.xlu0 %65, %v33
  %v67 = vpop.permute.xlu0 %66
  %70 = vset.pattern.permute.xlu0 0
  %71 = vperm.xlu0 %70, %v34
  %v72 = vpop.permute.xlu0 %71
  %75 = vset.pattern.permute.xlu0 0
  %76 = vperm.xlu0 %75, %v35
  %v77 = vpop.permute.xlu0 %76
  %vm79 = vcmask 64512
  %v81 = vsel %vm79, %v20, 0
  %v84 = vsel %vm79, %v21, 0
  %v87 = vsel %vm79, %v22, 0
  %v90 = vsel %vm79, %v23, 0
  %v93 = vsel %vm79, %v24, 0
  %v96 = vsel %vm79, %v25, 0
  %v99 = vsel %vm79, %v26, 0
  %v102 = vsel %vm79, %v27, 0
  %104 = vmatpush.msra.mxu0 0.0
  %105 = vmatpush.msra.mxu0 0.0
  %106 = vmatpush.msra.mxu0 0.0
  %107 = vmatpush.msra.mxu0 0.0
  %108 = vmatpush.msra.mxu0 0.0
  %109 = vmatpush.msra.mxu0 0.0
  %110 = vmatpush.msra.mxu0 0.0
  %111 = vmatpush.msra.mxu0 0.0
  %112 = vmatpush.msra.mxu0 0.0
  %113 = vmatpush.msra.mxu0 0.0
  %114 = vmatpush.msra.mxu0 0.0
  %115 = vmatpush.msra.mxu0 0.0
  %116 = vmatpush.msra.mxu0 0.0
  %117 = vmatpush.msra.mxu0 0.0
  %118 = vmatpush.msra.mxu0 0.0
  %119 = vmatpush.msra.mxu0 %v38
  %120 = vmatmul.f32.gmra.mxu0 %v81
  %v121 = vpop.f32.mrf.mxu0
  %v122 = vadd.f32 %v42, %v121
  %123 = vmatmul.f32.gmra.mxu0 %v84
  %v124 = vpop.f32.mrf.mxu0
  %v125 = vadd.f32 %v47, %v124
  %126 = vmatmul.f32.gmra.mxu0 %v87
  %v127 = vpop.f32.mrf.mxu0
  %v128 = vadd.f32 %v52, %v127
  %129 = vmatmul.f32.gmra.mxu0 %v90
  %v130 = vpop.f32.mrf.mxu0
  %v131 = vadd.f32 %v57, %v130
  %132 = vmatmul.f32.gmra.mxu0 %v93
  %v133 = vpop.f32.mrf.mxu0
  %v134 = vadd.f32 %v62, %v133
  %135 = vmatmul.f32.gmra.mxu0 %v96
  %v136 = vpop.f32.mrf.mxu0
  %v137 = vadd.f32 %v67, %v136
  %138 = vmatmul.f32.gmra.mxu0 %v99
  %v139 = vpop.f32.mrf.mxu0
  %v140 = vadd.f32 %v72, %v139
  %141 = vmatmul.f32.gmra.mxu0 %v102
  %v142 = vpop.f32.mrf.mxu0
  %v143 = vadd.f32 %v77, %v142
  %144 = vdwg.mxu0
  %v145 = vmax.f32 %v122, 0.0
  %v146 = vmax.f32 %v125, 0.0
  %v147 = vmax.f32 %v128, 0.0
  %v148 = vmax.f32 %v131, 0.0
  %v149 = vmax.f32 %v134, 0.0
  %v150 = vmax.f32 %v137, 0.0
  %v151 = vmax.f32 %v140, 0.0
  %v152 = vmax.f32 %v143, 0.0
  %154 = vset.pattern.permute.xlu0 0
  %155 = vperm.xlu0 %154, %v37
  %v156 = vpop.permute.xlu0 %155
  %vm158 = vcmask 523264
  %v160 = vsel %vm158, %v36, 0
  %162 = vmatpush.msra.mxu0 0.0
  %163 = vmatpush.msra.mxu0 0.0
  %164 = vmatpush.msra.mxu0 0.0
  %165 = vmatpush.msra.mxu0 0.0
  %166 = vmatpush.msra.mxu0 0.0
  %167 = vmatpush.msra.mxu0 0.0
  %168 = vmatpush.msra.mxu0 0.0
  %169 = vmatpush.msra.mxu0 0.0
  %170 = vmatpush.msra.mxu0 %v152
  %171 = vmatpush.msra.mxu0 %v151
  %172 = vmatpush.msra.mxu0 %v150
  %173 = vmatpush.msra.mxu0 %v149
  %174 = vmatpush.msra.mxu0 %v148
  %175 = vmatpush.msra.mxu0 %v147
  %176 = vmatpush.msra.mxu0 %v146
  %177 = vmatpush.msra.mxu0 %v145
  %178 = vmatmul.f32.gmra.mxu0 %v160
  %v179 = vpop.f32.mrf.mxu0
  %v180 = vadd.f32 %v156, %v179
  %181 = vdwg.mxu0
  %182 = vst [vmem:[%s5] sm:$0x3] %v180
  // Predicated region
  $region22: #{diabetes_model_forward.1} parent=0 // pred_check
    _
  $region23: #{diabetes_model_forward.1} parent=0 // pred_check_branch
    %184 = sbr.rel (0) target = $region25
  $region24: #{diabetes_model_forward.1} parent=0 // pred_region
    _
  $region25: #{diabetes_model_forward.1} parent=0 // pred_fallthru
    _
  // Predicated region
  $region26: #{diabetes_model_forward.1} parent=0 // pred_check
    _
  $region27: #{diabetes_model_forward.1} parent=0 // pred_check_branch
    %186 = sbr.rel (0) target = $region29
  $region28: #{diabetes_model_forward.1} parent=0 // pred_region
    _
  $region29: #{diabetes_model_forward.1} parent=0 // pred_fallthru
    _

</llo_original>
